<compile_context>
chip_gen: v5e
topology: v5e:2x2
jax: 0.10.0
libtpu: 0.0.40
codegen_flags: <defaults>
</compile_context>

<pallas_src>
import jax
import jax.numpy as jnp
from jax.experimental import pallas as pl
from jax.experimental.pallas import tpu as pltpu


_BLOCK_BYTES_TARGET = 4 * 1024 * 1024     # per-block cap (x4 when double-buffered in+out)
_VMEM_LIMIT_BYTES = 32 * 1024 * 1024      # explicit scoped-VMEM limit (safe on v5e/v6e/v7x)


def _pick_row_tile(r, per_row_bytes):
    """Row-tile size TR for the second-to-last block dim.

    Prefers the largest multiple of 8 that divides `r` and keeps one block under
    the byte target; falls back to the full extent (always a legal block)."""
    cap = max(1, _BLOCK_BYTES_TARGET // max(per_row_bytes, 1))
    if r <= cap:
        return r
    best = 0
    for t in range(8, cap + 1, 8):
        if r % t == 0:
            best = t
    return best if best > 0 else r


# ----------------------------- Pallas kernels ------------------------------ #

def _dwt_butterfly_kernel(x_ref, o_ref):
    # x_ref block: (1, 4, TR, W2); axis 1 packs input parity as p*2+q
    #   0: even row / even col -> x1      1: even row / odd col -> x3
    #   2: odd  row / even col -> x2      3: odd  row / odd col -> x4
    # o_ref block: (1, 4, TR, W2); axis 1 = [LL, HL, LH, HH]
    f32 = jnp.float32
    dt = o_ref.dtype
    x1 = x_ref[0, 0].astype(f32)
    x3 = x_ref[0, 1].astype(f32)
    x2 = x_ref[0, 2].astype(f32)
    x4 = x_ref[0, 3].astype(f32)
    s12 = x1 + x2
    s34 = x3 + x4
    # 0.5 scale folded into the butterfly; one subband stored at a time.
    o_ref[0, 0] = ((s12 + s34) * 0.5).astype(dt)                    # LL
    o_ref[0, 1] = ((s34 - s12) * 0.5).astype(dt)                    # HL
    o_ref[0, 2] = (((x2 + x4) - (x1 + x3)) * 0.5).astype(dt)        # LH
    o_ref[0, 3] = (((x1 + x4) - (x2 + x3)) * 0.5).astype(dt)        # HH


def _iwt_butterfly_kernel(x_ref, o_ref):
    # x_ref block: (1, 4, TR, W); axis 1 = [LL, HL, LH, HH] = [x1, x2, x3, x4]
    # o_ref block: (1, 4, TR, W); axis 1 packs output parity as p*2+q
    f32 = jnp.float32
    dt = o_ref.dtype
    x1 = x_ref[0, 0].astype(f32)
    x2 = x_ref[0, 1].astype(f32)
    x3 = x_ref[0, 2].astype(f32)
    x4 = x_ref[0, 3].astype(f32)
    o_ref[0, 0] = (((x1 + x4) - (x2 + x3)) * 0.5).astype(dt)        # h[0::2, 0::2]
    o_ref[0, 1] = (((x1 + x2) - (x3 + x4)) * 0.5).astype(dt)        # h[0::2, 1::2]
    o_ref[0, 2] = (((x1 + x3) - (x2 + x4)) * 0.5).astype(dt)        # h[1::2, 0::2]
    o_ref[0, 3] = ((x1 + x2 + x3 + x4) * 0.5).astype(dt)            # h[1::2, 1::2]


# ------------------------------- wrappers ----------------------------------- #

@jax.jit
def dwt_pallas(x):
    """Haar DWT, matches torch dwt_init. x: (N, C, H, W) -> (N, 4C, H/2, W/2)."""
    N, C, H, W = x.shape
    if H % 2 or W % 2:
        raise ValueError("dwt_pallas requires even H and W, got %s" % str(x.shape))
    H2, W2 = H // 2, W // 2
    R = C * H2

    # Single fused relayout pass: NCHW -> (N, 4[p*2+q], C*H2, W2).
    xl = x.reshape(N, C, H2, 2, W2, 2)
    xl = jnp.transpose(xl, (0, 3, 5, 1, 2, 4)).reshape(N, 4, R, W2)

    tr = _pick_row_tile(R, 4 * W2 * x.dtype.itemsize)
    block = (1, 4, tr, W2)
    out = pl.pallas_call(
        _dwt_butterfly_kernel,
        out_shape=jax.ShapeDtypeStruct((N, 4, R, W2), x.dtype),
        grid_spec=pltpu.PrefetchScalarGridSpec(
            num_scalar_prefetch=0,
            grid=(N, R // tr),
            in_specs=[pl.BlockSpec(block, lambda n, r: (n, 0, r, 0))],
            out_specs=pl.BlockSpec(block, lambda n, r: (n, 0, r, 0)),
        ),
        # xl is a fresh intermediate -> safe to write the result in place.
        input_output_aliases={0: 0},
        compiler_params=pltpu.CompilerParams(
            dimension_semantics=("parallel", "parallel"),
            vmem_limit_bytes=_VMEM_LIMIT_BYTES,
        ),
    )(xl)

    # Free reshape (leading dims only): (N,4,C*H2,W2) -> (N,4C,H2,W2)
    # == cat([LL, HL, LH, HH], dim=1) in torch order.
    return out.reshape(N, 4 * C, H2, W2)


@jax.jit
def iwt_pallas(x):
    """Haar IWT, matches torch iwt_init. x: (N, 4C, H, W) -> (N, C, 2H, 2W)."""
    N, C4, H, W = x.shape
    if C4 % 4:
        raise ValueError("iwt_pallas requires channels divisible by 4, got %s" % str(x.shape))
    C = C4 // 4
    R = C * H

    # Free reshape (leading dims only): subband index becomes its own axis.
    xl = x.reshape(N, 4, R, W)

    tr = _pick_row_tile(R, 4 * W * x.dtype.itemsize)
    block = (1, 4, tr, W)
    out = pl.pallas_call(
        _iwt_butterfly_kernel,
        out_shape=jax.ShapeDtypeStruct((N, 4, R, W), x.dtype),
        grid_spec=pltpu.PrefetchScalarGridSpec(
            num_scalar_prefetch=0,
            grid=(N, R // tr),
            in_specs=[pl.BlockSpec(block, lambda n, r: (n, 0, r, 0))],
            out_specs=pl.BlockSpec(block, lambda n, r: (n, 0, r, 0)),
        ),
        # No aliasing here: xl is just a reshaped view of the caller's array, so
        # aliasing would force XLA to insert a defensive copy (extra HBM pass).
        compiler_params=pltpu.CompilerParams(
            dimension_semantics=("parallel", "parallel"),
            vmem_limit_bytes=_VMEM_LIMIT_BYTES,
        ),
    )(xl)

    # Single fused interleave pass back to NCHW: (N,4[p*2+q],C*H,W) -> (N,C,2H,2W).
    h = out.reshape(N, 2, 2, C, H, W)
    h = jnp.transpose(h, (0, 3, 4, 1, 5, 2)).reshape(N, C, 2 * H, 2 * W)
    return h


# -------------------------- pure-JAX references ----------------------------- #

def dwt_ref(x):
    x01 = x[:, :, 0::2, :] / 2
    x02 = x[:, :, 1::2, :] / 2
    x1 = x01[:, :, :, 0::2]
    x2 = x02[:, :, :, 0::2]
    x3 = x01[:, :, :, 1::2]
    x4 = x02[:, :, :, 1::2]
    return jnp.concatenate(
        [x1 + x2 + x3 + x4, -x1 - x2 + x3 + x4,
         -x1 + x2 - x3 + x4, x1 - x2 - x3 + x4], axis=1)


def iwt_ref(x):
    N, C4, H, W = x.shape
    C = C4 // 4
    x1 = x[:, 0 * C:1 * C] / 2
    x2 = x[:, 1 * C:2 * C] / 2
    x3 = x[:, 2 * C:3 * C] / 2
    x4 = x[:, 3 * C:4 * C] / 2
    h = jnp.zeros((N, C, 2 * H, 2 * W), jnp.float32)
    h = h.at[:, :, 0::2, 0::2].set(x1 - x2 - x3 + x4)
    h = h.at[:, :, 1::2, 0::2].set(x1 - x2 + x3 - x4)
    h = h.at[:, :, 0::2, 1::2].set(x1 + x2 - x3 - x4)
    h = h.at[:, :, 1::2, 1::2].set(x1 + x2 + x3 + x4)
    return h


# ------------------------------- VSN module --------------------------------- #

class VSNPallas:
    """Pallas translation of VSN's forward pass (mode='image').

    The Haar DWT / IWT (the only concretely defined compute in the reference
    source) run as Pallas TPU kernels.  The invertible network (InvNN), the bit
    encoder/decoder (DW_Encoder / DW_Decoder) and the predictive module
    (PredictiveModuleMIMO_prompt) are referenced by the original module but
    their definitions were not provided.
    """

    def __init__(self, opt):
        self.model = opt['model']
        self.mode = opt['mode']
        opt_net = opt['network_G']
        self.num_image = opt['num_image']
        self.gop = opt['gop']
        self.channel_in = opt_net['in_nc'] * self.gop
        self.channel_out = opt_net['out_nc'] * self.gop
        self.message_len = opt['message_length']
        self.block_num = opt_net['block_num']
        self.nf = self.channel_in
        # TODO(synk): DW_Encoder / DW_Decoder / InvNN / PredictiveModuleMIMO_prompt
        # are undefined in the provided source; `irn` is treated as identity below
        # and no parameters are instantiated for those submodules.

    def forward(self, x, x_h=None, message=None, rev=False):
        if not rev and self.mode == 'image':
            # TODO(synk): out_y, out_y_h = self.irn(x, x_h, rev)  (InvNN unavailable)
            out_y, out_y_h = x, x_h
            out_y = iwt_pallas(out_y)
            encoded_image = out_y
            return out_y, encoded_image
        if rev and self.mode == 'image':
            x_w = dwt_pallas(x)
            # TODO(synk): predictive module + InvNN reverse pass unavailable.
            return x_w
        raise NotImplementedError("only mode='image' paths are implemented")


# --------------------------------- main -------------------------------------- #

if __name__ == "__main__":
    key = jax.random.PRNGKey(0)

    # small shapes: batch=2, wavelet-domain channels=16 (=> 4 image channels),
    # wavelet-domain spatial 8x8 (=> 16x16 image).
    N, in_nc, gop = 2, 16, 1
    H, W = 8, 8
    x = jax.random.normal(key, (N, in_nc * gop, H, W), dtype=jnp.float32)

    opt = {
        'model': 'base', 'mode': 'image', 'num_image': 1, 'gop': gop,
        'message_length': 30, 'prompt': False,
        'network_G': {'in_nc': in_nc, 'out_nc': in_nc, 'block_num': 2,
                      'block_num_rbm': 2, 'block_num_trans': 2},
    }

    vsn = VSNPallas(opt)

    # forward (rev=False, mode='image'): out_y = iwt(irn(x)); irn == identity stub.
    out_y, encoded_image = vsn.forward(x)
    jax.block_until_ready(out_y)

    ref_y = iwt_ref(x)
    assert out_y.shape == (N, in_nc // 4, 2 * H, 2 * W), out_y.shape
    assert out_y.dtype == jnp.float32
    assert jnp.allclose(out_y, ref_y, atol=1e-5, rtol=1e-5)
    assert jnp.allclose(encoded_image, ref_y, atol=1e-5, rtol=1e-5)

    # reverse-path entry compute (dwt) + Haar round-trip check: dwt(iwt(x)) == x.
    x_back = vsn.forward(out_y, rev=True)
    jax.block_until_ready(x_back)
    assert x_back.shape == x.shape
    assert jnp.allclose(x_back, dwt_ref(out_y), atol=1e-5, rtol=1e-5)
    assert jnp.allclose(x_back, x, atol=1e-5, rtol=1e-5)

    # dtype-preserving bf16 path (half the HBM traffic; f32 math in-kernel).
    xb = jax.random.normal(jax.random.PRNGKey(1), (2, 16, 16, 16), dtype=jnp.float32)
    xb16 = xb.astype(jnp.bfloat16)
    yb16 = iwt_pallas(xb16)
    jax.block_until_ready(yb16)
    assert yb16.dtype == jnp.bfloat16
    ref_b = iwt_ref(xb16.astype(jnp.float32))
    assert jnp.allclose(yb16.astype(jnp.float32), ref_b, atol=1e-1, rtol=1e-1)
    zb16 = dwt_pallas(yb16)
    jax.block_until_ready(zb16)
    assert zb16.dtype == jnp.bfloat16
    assert jnp.allclose(zb16.astype(jnp.float32), xb16.astype(jnp.float32),
                        atol=1e-1, rtol=1e-1)

    print("KERNEL_OK")
</pallas_src>

<mosaic_0001>
module attributes {stable_mosaic.version = 11 : i64} {
  func.func @_iwt_butterfly_kernel(%arg0: i32, %arg1: i32, %arg2: memref<1x4x32x8xf32, #tpu.memory_space<vmem>>, %arg3: memref<1x4x32x8xf32, #tpu.memory_space<vmem>>) attributes {dimension_semantics = [#tpu.dimension_semantics<parallel>, #tpu.dimension_semantics<parallel>], iteration_bounds = array<i64: 2, 1>, scalar_prefetch = 0 : i64, scratch_operands = 0 : i64, tpu.core_type = #tpu.core_type<tc>, window_params = [{transform_indices = @transform_0, window_bounds = array<i64: 1, 4, 32, 8>}, {transform_indices = @transform_1, window_bounds = array<i64: 1, 4, 32, 8>}]} {
    %c0 = arith.constant 0 : index
    %c0_0 = arith.constant 0 : index
    %c0_1 = arith.constant 0 : index
    %c0_2 = arith.constant 0 : index
    %0 = vector.load %arg2[%c0, %c0_0, %c0_1, %c0_2] : memref<1x4x32x8xf32, #tpu.memory_space<vmem>>, vector<1x1x32x8xf32>
    %1 = vector.shape_cast %0 : vector<1x1x32x8xf32> to vector<32x8xf32>
    %c0_3 = arith.constant 0 : index
    %c1 = arith.constant 1 : index
    %c0_4 = arith.constant 0 : index
    %c0_5 = arith.constant 0 : index
    %2 = vector.load %arg2[%c0_3, %c1, %c0_4, %c0_5] : memref<1x4x32x8xf32, #tpu.memory_space<vmem>>, vector<1x1x32x8xf32>
    %3 = vector.shape_cast %2 : vector<1x1x32x8xf32> to vector<32x8xf32>
    %c0_6 = arith.constant 0 : index
    %c2 = arith.constant 2 : index
    %c0_7 = arith.constant 0 : index
    %c0_8 = arith.constant 0 : index
    %4 = vector.load %arg2[%c0_6, %c2, %c0_7, %c0_8] : memref<1x4x32x8xf32, #tpu.memory_space<vmem>>, vector<1x1x32x8xf32>
    %5 = vector.shape_cast %4 : vector<1x1x32x8xf32> to vector<32x8xf32>
    %c0_9 = arith.constant 0 : index
    %c3 = arith.constant 3 : index
    %c0_10 = arith.constant 0 : index
    %c0_11 = arith.constant 0 : index
    %6 = vector.load %arg2[%c0_9, %c3, %c0_10, %c0_11] : memref<1x4x32x8xf32, #tpu.memory_space<vmem>>, vector<1x1x32x8xf32>
    %7 = vector.shape_cast %6 : vector<1x1x32x8xf32> to vector<32x8xf32>
    %8 = arith.addf %1, %7 : vector<32x8xf32>
    %9 = arith.addf %3, %5 : vector<32x8xf32>
    %10 = arith.subf %8, %9 : vector<32x8xf32>
    %cst = arith.constant 5.000000e-01 : f32
    %11 = vector.broadcast %cst : f32 to vector<32x8xf32>
    %12 = arith.mulf %10, %11 : vector<32x8xf32>
    %c0_12 = arith.constant 0 : index
    %c0_13 = arith.constant 0 : index
    %c0_14 = arith.constant 0 : index
    %c0_15 = arith.constant 0 : index
    %13 = vector.load %arg3[%c0_12, %c0_13, %c0_14, %c0_15] : memref<1x4x32x8xf32, #tpu.memory_space<vmem>>, vector<1x1x32x8xf32>
    %14 = vector.shape_cast %13 : vector<1x1x32x8xf32> to vector<32x8xf32>
    %15 = vector.shape_cast %12 : vector<32x8xf32> to vector<1x1x32x8xf32>
    tpu.vector_store %arg3[%c0_12, %c0_13, %c0_14, %c0_15], %15 {strides = array<i32>} : memref<1x4x32x8xf32, #tpu.memory_space<vmem>>, vector<1x1x32x8xf32>,
    %16 = arith.addf %1, %3 : vector<32x8xf32>
    %17 = arith.addf %5, %7 : vector<32x8xf32>
    %18 = arith.subf %16, %17 : vector<32x8xf32>
    %cst_16 = arith.constant 5.000000e-01 : f32
    %19 = vector.broadcast %cst_16 : f32 to vector<32x8xf32>
    %20 = arith.mulf %18, %19 : vector<32x8xf32>
    %c0_17 = arith.constant 0 : index
    %c1_18 = arith.constant 1 : index
    %c0_19 = arith.constant 0 : index
    %c0_20 = arith.constant 0 : index
    %21 = vector.load %arg3[%c0_17, %c1_18, %c0_19, %c0_20] : memref<1x4x32x8xf32, #tpu.memory_space<vmem>>, vector<1x1x32x8xf32>
    %22 = vector.shape_cast %21 : vector<1x1x32x8xf32> to vector<32x8xf32>
    %23 = vector.shape_cast %20 : vector<32x8xf32> to vector<1x1x32x8xf32>
    tpu.vector_store %arg3[%c0_17, %c1_18, %c0_19, %c0_20], %23 {strides = array<i32>} : memref<1x4x32x8xf32, #tpu.memory_space<vmem>>, vector<1x1x32x8xf32>,
    %24 = arith.addf %1, %5 : vector<32x8xf32>
    %25 = arith.addf %3, %7 : vector<32x8xf32>
    %26 = arith.subf %24, %25 : vector<32x8xf32>
    %cst_21 = arith.constant 5.000000e-01 : f32
    %27 = vector.broadcast %cst_21 : f32 to vector<32x8xf32>
    %28 = arith.mulf %26, %27 : vector<32x8xf32>
    %c0_22 = arith.constant 0 : index
    %c2_23 = arith.constant 2 : index
    %c0_24 = arith.constant 0 : index
    %c0_25 = arith.constant 0 : index
    %29 = vector.load %arg3[%c0_22, %c2_23, %c0_24, %c0_25] : memref<1x4x32x8xf32, #tpu.memory_space<vmem>>, vector<1x1x32x8xf32>
    %30 = vector.shape_cast %29 : vector<1x1x32x8xf32> to vector<32x8xf32>
    %31 = vector.shape_cast %28 : vector<32x8xf32> to vector<1x1x32x8xf32>
    tpu.vector_store %arg3[%c0_22, %c2_23, %c0_24, %c0_25], %31 {strides = array<i32>} : memref<1x4x32x8xf32, #tpu.memory_space<vmem>>, vector<1x1x32x8xf32>,
    %32 = arith.addf %1, %3 : vector<32x8xf32>
    %33 = arith.addf %32, %5 : vector<32x8xf32>
    %34 = arith.addf %33, %7 : vector<32x8xf32>
    %cst_26 = arith.constant 5.000000e-01 : f32
    %35 = vector.broadcast %cst_26 : f32 to vector<32x8xf32>
    %36 = arith.mulf %34, %35 : vector<32x8xf32>
    %c0_27 = arith.constant 0 : index
    %c3_28 = arith.constant 3 : index
    %c0_29 = arith.constant 0 : index
    %c0_30 = arith.constant 0 : index
    %37 = vector.load %arg3[%c0_27, %c3_28, %c0_29, %c0_30] : memref<1x4x32x8xf32, #tpu.memory_space<vmem>>, vector<1x1x32x8xf32>
    %38 = vector.shape_cast %37 : vector<1x1x32x8xf32> to vector<32x8xf32>
    %39 = vector.shape_cast %36 : vector<32x8xf32> to vector<1x1x32x8xf32>
    tpu.vector_store %arg3[%c0_27, %c3_28, %c0_29, %c0_30], %39 {strides = array<i32>} : memref<1x4x32x8xf32, #tpu.memory_space<vmem>>, vector<1x1x32x8xf32>,
    return
  }
  func.func @transform_0(%arg0: i32, %arg1: i32) -> (i32, i32, i32, i32) {
    %c0_i32 = arith.constant 0 : i32
    %c0_i32_0 = arith.constant 0 : i32
    %c0_i32_1 = arith.constant 0 : i32
    return %arg0, %c0_i32, %arg1, %c0_i32_0 : i32, i32, i32, i32
  }
  func.func @transform_1(%arg0: i32, %arg1: i32) -> (i32, i32, i32, i32) {
    %c0_i32 = arith.constant 0 : i32
    %c0_i32_0 = arith.constant 0 : i32
    %c0_i32_1 = arith.constant 0 : i32
    return %arg0, %c0_i32, %arg1, %c0_i32_0 : i32, i32, i32, i32
  }
}

</mosaic_0001>

<llo_original>
// kernel: iwt_pallas.1
$region0: #{iwt_pallas.1}
  #allocation0 [shape = 'u32[]', space=smem, size = 0x4, offset = 0x4, fixed_abs, tag = 'smem constant byte address 0x4 - core index']
  #allocation1 [shape = 'u32[72,128]{1,0:T(1,128)}', space=vmem, size = 0x9000, scoped, tag = 'internal scratch']
  %s0 = inlined_call_operand.vmem [shape: f32[2,4,32,8], index: 0, kind: input, shape index: {}]
  %s1 = inlined_call_operand.vmem [shape: f32[2,4,32,8], index: 1, kind: output, shape index: {}]
  %s2 = sld [smem:[#allocation0]]
  $region37: #{iwt_pallas.1} parent=0
    _
  %s4 = ssub.s32 1, %s2
  %s5 = scalar_select 0, %s4, %s2
  loop: start=0, step=1, limit=4
  $region2: #{iwt_pallas.1} parent=0 // loop_pre_header
    _
  $region3: #{iwt_pallas.1} parent=0 // loop_header
    %s7 = sphi 0, %s11
    %p8 = scmp.ge.s32.totalorder %s7, 4
    %s14 = sphi 0, %s26
    %s15 = sphi 0, %s22
    %s16 = sphi 0, %s14
    %s17 = sphi 0, %s15
    %s18 = sphi 0, %s16
    %s19 = sphi 0, %s17
    %s31 = sphi 0, %s33
    %s34 = sphi 0, %s31
    %s35 = sphi 0, %s34
    %s51 = sphi 0, %s35
    %s59 = sphi 0, %s61
    %s62 = sphi 0, %s59
    %s63 = sphi 0, %s62
    %s79 = sphi 0, %s63
  $region4: #{iwt_pallas.1} parent=0 // loop_header_branch
    %10 = sbr.rel (%p8) target = $region8
  $region5: #{iwt_pallas.1} parent=0 // loop_body
    %s12 = ssub.s32 %s7, 1
    %s13 = ssub.s32 %s7, 2
    %s20 = sadd.s32 1, %s15
    %p21 = scmp.ge.s32.totalorder %s20, 1
    %s22 = scalar_select %p21, 0, %s20
    %s23 = sadd.s32 1, %s14
    %s24 = scalar_select %p21, %s23, %s14
    %p25 = scmp.ge.s32.totalorder %s24, 2
    %s26 = scalar_select %p25, 0, %s24
    %s27 = ssub.s32 %s14, %s26
    %s28 = ssub.s32 %s15, %s22
    %s29 = sor.u32 %s27, %s28
    %p30 = scmp.eq.s32.totalorder %s29, 0
    %s32 = sadd.s32 %s31, 1
    %s33 = scalar_select %p30, %s31, %s32
    %p36 = pneg %p30
    %p37 = scmp.eq.s32.totalorder %s7, 1
    %p38 = por %p36, %p37
    %p39 = scmp.ne.s32.totalorder %s31, %s34
    %p40 = scmp.eq.s32.totalorder %s7, 0
    %p41 = por %p39, %p40
    %p42 = scmp.ne.s32.totalorder %s31, %s34
    %p43 = scmp.eq.s32.totalorder %s12, 1
    %p44 = por %p42, %p43
    %p45 = scmp.ne.s32.totalorder %s34, %s35
    %p46 = scmp.eq.s32.totalorder %s12, 0
    %p47 = por %p45, %p46
    %p48 = scmp.ne.s32.totalorder %s34, %s35
    %p49 = scmp.eq.s32.totalorder %s13, 1
    %p50 = por %p48, %p49
    %p52 = scmp.ne.s32.totalorder %s35, %s51
    %p53 = scmp.eq.s32.totalorder %s13, 0
    %p54 = por %p52, %p53
    %s55 = ssub.s32 %s14, %s26
    %s56 = ssub.s32 %s15, %s22
    %s57 = sor.u32 %s55, %s56
    %p58 = scmp.eq.s32.totalorder %s57, 0
    %s60 = sadd.s32 %s59, 1
    %s61 = scalar_select %p58, %s59, %s60
    %p64 = pneg %p58
    %p65 = scmp.eq.s32.totalorder %s7, 1
    %p66 = por %p64, %p65
    %p67 = scmp.ne.s32.totalorder %s59, %s62
    %p68 = scmp.eq.s32.totalorder %s7, 0
    %p69 = por %p67, %p68
    %p70 = scmp.ne.s32.totalorder %s59, %s62
    %p71 = scmp.eq.s32.totalorder %s12, 1
    %p72 = por %p70, %p71
    %p73 = scmp.ne.s32.totalorder %s62, %s63
    %p74 = scmp.eq.s32.totalorder %s12, 0
    %p75 = por %p73, %p74
    %p76 = scmp.ne.s32.totalorder %s62, %s63
    %p77 = scmp.eq.s32.totalorder %s13, 1
    %p78 = por %p76, %p77
    %p80 = scmp.ne.s32.totalorder %s63, %s79
    %p81 = scmp.eq.s32.totalorder %s13, 0
    %p82 = por %p80, %p81
    %p83 = scmp.le.s32.totalorder 1, %s7
    %p84 = scmp.lt.s32.totalorder %s7, 3
    %p85 = pnand %p83, %p84
    %p86 = pneg %p85
    // Predicated region
    $region9: #{iwt_pallas.1} parent=5 // pred_check
      _
    $region10: #{iwt_pallas.1} parent=5 // pred_check_branch
      %88 = sbr.rel (%p85) target = $region12
    $region11: #{iwt_pallas.1} parent=5 // pred_region
      %s89 = ssub.s32 %s7, 1
    $region12: #{iwt_pallas.1} parent=5 // pred_fallthru
      _
    %p90 = scmp.lt.s32.totalorder %s7, 2
    // Predicated region
    $region13: #{iwt_pallas.1} parent=5 // pred_check
      %p91 = pneg %p90
    $region14: #{iwt_pallas.1} parent=5 // pred_check_branch
      %93 = sbr.rel (%p91) target = $region16
    $region15: #{iwt_pallas.1} parent=5 // pred_region
      // Predicated region
      $region17: #{iwt_pallas.1} parent=15 // pred_check
        %p94 = pneg %p41
      $region18: #{iwt_pallas.1} parent=15 // pred_check_branch
        %96 = sbr.rel (%p94) target = $region20
      $region19: #{iwt_pallas.1} parent=15 // pred_region
        %s97 = smul.u32 4, %s15
        %p98 = scmp.lt.s32.totalorder %s14, 1
        %s99 = scalar_select %p98, %s14, 1
        %p100 = scmp.lt.s32.totalorder %s97, 3
        %s101 = scalar_select %p100, %s97, 3
        %s102 = smul.addr %s99, 16
        %s103 = sadd.s32 %s101, %s102
        %s104 = smul.addr %s103, 8
        %s105 = scalar_lea.vmem %s0, %s104
        %s106 = smul.u32 4, %s15
      $region20: #{iwt_pallas.1} parent=15 // pred_fallthru
        _
    $region16: #{iwt_pallas.1} parent=5 // pred_fallthru
      _
    %p107 = scmp.le.s32.totalorder 1, %s7
    %p108 = scmp.lt.s32.totalorder %s7, 3
    %p109 = pnand %p107, %p108
    %p110 = pneg %p109
    // Predicated region
    $region21: #{iwt_pallas.1} parent=5 // pred_check
      _
    $region22: #{iwt_pallas.1} parent=5 // pred_check_branch
      %112 = sbr.rel (%p109) target = $region24
    $region23: #{iwt_pallas.1} parent=5 // pred_region
      %s113 = ssub.s32 %s7, 1
      %s114 = smul.u32 4, %s17
      %p115 = scmp.lt.s32.totalorder %s16, 1
      %s116 = scalar_select %p115, %s16, 1
      %p117 = scmp.lt.s32.totalorder %s114, 3
      %s118 = scalar_select %p117, %s114, 3
      %s119 = smul.addr %s116, 16
      %s120 = sadd.s32 %s118, %s119
      %s121 = smul.addr %s120, 8
      %s122 = scalar_lea.vmem %s0, %s121
      %p123 = pneg %p47
      %p124 = pneg %p44
      %p125 = pneg %p75
      %p126 = pneg %p72
      %s127 = smul.u32 4, %s17
      %p128 = scmp.lt.s32.totalorder %s16, 1
      %s129 = scalar_select %p128, %s16, 1
      %p130 = scmp.lt.s32.totalorder %s127, 3
      %s131 = scalar_select %p130, %s127, 3
      %s132 = smul.addr %s129, 16
      %s133 = sadd.s32 %s131, %s132
      %s134 = smul.addr %s133, 8
      %s135 = scalar_lea.vmem %s1, %s134
      %s136 = smul.u32 4, %s17
      %p137 = scmp.lt.s32.totalorder %s16, 1
      %s138 = scalar_select %p137, %s16, 1
      %p139 = scmp.lt.s32.totalorder %s136, 3
      %s140 = scalar_select %p139, %s136, 3
      %s141 = smul.addr %s138, 16
      %s142 = sadd.s32 %s140, %s141
      %s143 = smul.addr %s142, 8
      %s144 = scalar_lea.vmem %s0, %s143
      %s145 = smul.u32 4, %s17
      %s146 = smul.u32 4, %s17
      %p147 = scmp.lt.s32.totalorder %s16, 1
      %s148 = scalar_select %p147, %s16, 1
      %p149 = scmp.lt.s32.totalorder %s146, 3
      %s150 = scalar_select %p149, %s146, 3
      %s151 = smul.addr %s148, 16
      %s152 = sadd.s32 %s150, %s151
      %s153 = smul.addr %s152, 8
      %s154 = scalar_lea.vmem %s1, %s153
      %s155 = smul.u32 4, %s17
      %v156 = vld [vmem:[%s144] sm:$0xff]
      %v157 = vld [vmem:[%s144 + $0x8] sm:$0xff]
      %v158 = vld [vmem:[%s144 + $0x10] sm:$0xff]
      %v159 = vld [vmem:[%s144 + $0x18] sm:$0xff]
      %s160 = scalar_lea.vmem %s144, 32
      %v161 = vld [vmem:[%s160] sm:$0xff]
      %v162 = vld [vmem:[%s160 + $0x8] sm:$0xff]
      %v163 = vld [vmem:[%s160 + $0x10] sm:$0xff]
      %v164 = vld [vmem:[%s160 + $0x18] sm:$0xff]
      %s165 = scalar_lea.vmem %s144, 64
      %v166 = vld [vmem:[%s165] sm:$0xff]
      %v167 = vld [vmem:[%s165 + $0x8] sm:$0xff]
      %v168 = vld [vmem:[%s165 + $0x10] sm:$0xff]
      %v169 = vld [vmem:[%s165 + $0x18] sm:$0xff]
      %s170 = scalar_lea.vmem %s144, 96
      %v171 = vld [vmem:[%s170] sm:$0xff]
      %v172 = vld [vmem:[%s170 + $0x8] sm:$0xff]
      %v173 = vld [vmem:[%s170 + $0x10] sm:$0xff]
      %v174 = vld [vmem:[%s170 + $0x18] sm:$0xff]
      %v175 = vadd.f32 %v156, %v171
      %v176 = vadd.f32 %v157, %v172
      %v177 = vadd.f32 %v158, %v173
      %v178 = vadd.f32 %v159, %v174
      %v179 = vadd.f32 %v161, %v166
      %v180 = vadd.f32 %v162, %v167
      %v181 = vadd.f32 %v163, %v168
      %v182 = vadd.f32 %v164, %v169
      %v183 = vsub.f32 %v175, %v179
      %v184 = vsub.f32 %v176, %v180
      %v185 = vsub.f32 %v177, %v181
      %v186 = vsub.f32 %v178, %v182
      %v187 = vmul.f32 %v183, 0.5
      %v188 = vmul.f32 %v184, 0.5
      %v189 = vmul.f32 %v185, 0.5
      %v190 = vmul.f32 %v186, 0.5
      %vm191 = vcmask 64512
      %192 = vst.msk [vmem:[%s154] sm:$0xff] %vm191, %v187
      %193 = vst.msk [vmem:[%s154 + $0x8] sm:$0xff] %vm191, %v188
      %194 = vst.msk [vmem:[%s154 + $0x10] sm:$0xff] %vm191, %v189
      %195 = vst.msk [vmem:[%s154 + $0x18] sm:$0xff] %vm191, %v190
      %v196 = vadd.f32 %v156, %v161
      %v197 = vadd.f32 %v157, %v162
      %v198 = vadd.f32 %v158, %v163
      %v199 = vadd.f32 %v159, %v164
      %v200 = vadd.f32 %v166, %v171
      %v201 = vadd.f32 %v167, %v172
      %v202 = vadd.f32 %v168, %v173
      %v203 = vadd.f32 %v169, %v174
      %v204 = vsub.f32 %v196, %v200
      %v205 = vsub.f32 %v197, %v201
      %v206 = vsub.f32 %v198, %v202
      %v207 = vsub.f32 %v199, %v203
      %v208 = vmul.f32 %v204, 0.5
      %v209 = vmul.f32 %v205, 0.5
      %v210 = vmul.f32 %v206, 0.5
      %v211 = vmul.f32 %v207, 0.5
      %s212 = scalar_lea.vmem %s154, 32
      %213 = vst.msk [vmem:[%s212] sm:$0xff] %vm191, %v208
      %214 = vst.msk [vmem:[%s212 + $0x8] sm:$0xff] %vm191, %v209
      %215 = vst.msk [vmem:[%s212 + $0x10] sm:$0xff] %vm191, %v210
      %216 = vst.msk [vmem:[%s212 + $0x18] sm:$0xff] %vm191, %v211
      %v217 = vadd.f32 %v156, %v166
      %v218 = vadd.f32 %v157, %v167
      %v219 = vadd.f32 %v158, %v168
      %v220 = vadd.f32 %v159, %v169
      %v221 = vadd.f32 %v161, %v171
      %v222 = vadd.f32 %v162, %v172
      %v223 = vadd.f32 %v163, %v173
      %v224 = vadd.f32 %v164, %v174
      %v225 = vsub.f32 %v217, %v221
      %v226 = vsub.f32 %v218, %v222
      %v227 = vsub.f32 %v219, %v223
      %v228 = vsub.f32 %v220, %v224
      %v229 = vmul.f32 %v225, 0.5
      %v230 = vmul.f32 %v226, 0.5
      %v231 = vmul.f32 %v227, 0.5
      %v232 = vmul.f32 %v228, 0.5
      %s233 = scalar_lea.vmem %s154, 64
      %234 = vst.msk [vmem:[%s233] sm:$0xff] %vm191, %v229
      %235 = vst.msk [vmem:[%s233 + $0x8] sm:$0xff] %vm191, %v230
      %236 = vst.msk [vmem:[%s233 + $0x10] sm:$0xff] %vm191, %v231
      %237 = vst.msk [vmem:[%s233 + $0x18] sm:$0xff] %vm191, %v232
      %v238 = vadd.f32 %v196, %v166
      %v239 = vadd.f32 %v197, %v167
      %v240 = vadd.f32 %v198, %v168
      %v241 = vadd.f32 %v199, %v169
      %v242 = vadd.f32 %v238, %v171
      %v243 = vadd.f32 %v239, %v172
      %v244 = vadd.f32 %v240, %v173
      %v245 = vadd.f32 %v241, %v174
      %v246 = vmul.f32 %v242, 0.5
      %v247 = vmul.f32 %v243, 0.5
      %v248 = vmul.f32 %v244, 0.5
      %v249 = vmul.f32 %v245, 0.5
      %s250 = scalar_lea.vmem %s154, 96
      %251 = vst.msk [vmem:[%s250] sm:$0xff] %vm191, %v246
      %252 = vst.msk [vmem:[%s250 + $0x8] sm:$0xff] %vm191, %v247
      %253 = vst.msk [vmem:[%s250 + $0x10] sm:$0xff] %vm191, %v248
      %254 = vst.msk [vmem:[%s250 + $0x18] sm:$0xff] %vm191, %v249
      %s255 = smul.u32 4, %s17
      %p256 = scmp.lt.s32.totalorder %s16, 1
      %s257 = scalar_select %p256, %s16, 1
      %p258 = scmp.lt.s32.totalorder %s255, 3
      %s259 = scalar_select %p258, %s255, 3
      %s260 = smul.addr %s257, 16
      %s261 = sadd.s32 %s259, %s260
      %s262 = smul.addr %s261, 8
      %s263 = scalar_lea.vmem %s1, %s262
      // Predicated region
      $region25: #{iwt_pallas.1} parent=23 // pred_check
        %p264 = pneg %p72
      $region26: #{iwt_pallas.1} parent=23 // pred_check_branch
        %266 = sbr.rel (%p264) target = $region28
      $region27: #{iwt_pallas.1} parent=23 // pred_region
        %s267 = smul.u32 4, %s17
      $region28: #{iwt_pallas.1} parent=23 // pred_fallthru
        _
    $region24: #{iwt_pallas.1} parent=5 // pred_fallthru
      _
    %p268 = scmp.le.s32.totalorder 2, %s7
    // Predicated region
    $region29: #{iwt_pallas.1} parent=5 // pred_check
      %p269 = pneg %p268
    $region30: #{iwt_pallas.1} parent=5 // pred_check_branch
      %271 = sbr.rel (%p269) target = $region32
    $region31: #{iwt_pallas.1} parent=5 // pred_region
      %s272 = ssub.s32 %s7, 2
      // Predicated region
      $region33: #{iwt_pallas.1} parent=31 // pred_check
        %p273 = pneg %p78
      $region34: #{iwt_pallas.1} parent=31 // pred_check_branch
        %275 = sbr.rel (%p273) target = $region36
      $region35: #{iwt_pallas.1} parent=31 // pred_region
        %s276 = smul.u32 4, %s19
        %p277 = scmp.lt.s32.totalorder %s18, 1
        %s278 = scalar_select %p277, %s18, 1
        %p279 = scmp.lt.s32.totalorder %s276, 3
        %s280 = scalar_select %p279, %s276, 3
        %s281 = smul.addr %s278, 16
        %s282 = sadd.s32 %s280, %s281
        %s283 = smul.addr %s282, 8
        %s284 = scalar_lea.vmem %s1, %s283
      $region36: #{iwt_pallas.1} parent=31 // pred_fallthru
        _
    $region32: #{iwt_pallas.1} parent=5 // pred_fallthru
      _
  $region6: #{iwt_pallas.1} parent=0 // loop_footer
    %s11 = sadd.s32 1, %s7
  $region7: #{iwt_pallas.1} parent=0 // loop_footer_branch
    %6 = sbr.rel target = $region3
  $region8: #{iwt_pallas.1} parent=0 // loop_exit
    _

</llo_original>
